<compile_context>
chip_gen: v7x
topology: tpu7x:2x2x1
jax: 0.10.0
libtpu: 0.0.40
codegen_flags: <defaults>
</compile_context>

<pallas_src>
import math

import jax
import jax.numpy as jnp
from jax.experimental import pallas as pl
from jax.experimental.pallas import tpu as pltpu


# ----------------------------------------------------------------------------
# helpers
# ----------------------------------------------------------------------------
def _round_up(x, m):
    return ((x + m - 1) // m) * m


def _tile_rows(r, wo, kp, np_):
    """Pick RB (pool row-groups per tile) so the output block rows (RB*WO) are
    a multiple of 8 (or the single block covers all of M) and the
    double-buffered working set fits an explicit VMEM budget."""
    step = 8 // math.gcd(wo, 8)                 # RB*WO % 8 == 0
    rb = max(1, 512 // max(wo, 1))              # target ~512 output rows / tile
    if rb >= r or step >= r:
        rb = r                                  # one tile: block == full M dim
    else:
        rb = max(step, (rb // step) * step)

    def vmem_bytes(rb_):
        xb = rb_ * 2 * _round_up(wo, 16) * 2 * kp * 2        # bf16 A block
        ob = _round_up(rb_ * wo, 8) * np_ * 4                # f32 out block
        wb = _round_up(kp, 16) * np_ * 2                     # bf16 weight
        sb = 2 * 8 * 2 * kp * 4                              # scale + bias
        return 2 * (xb + ob + wb + sb)                       # double buffers

    budget = 28 * 1024 * 1024
    while vmem_bytes(rb) > budget and rb > step:
        nrb = max(step, (rb // 2 // step) * step)
        if nrb == rb:
            break
        rb = nrb
    return rb, vmem_bytes(rb)


# ----------------------------------------------------------------------------
# fused Pallas kernel: BN + ReLU + 2x2 avg-pool + 1x1 conv (matmul)
# ----------------------------------------------------------------------------
def _transition_kernel(x_ref, s_ref, b_ref, w_ref, o_ref):
    """x_ref : (RB, 2, WO, 2*KP) bf16 -- RB pool row-groups; dim 1 = H parity of
               the 2x2 window, last dim = (W parity, channel) interleaved.
    s_ref : (1, 2*KP) f32  -- folded BN scale * 0.25, tiled twice
    b_ref : (1, 2*KP) f32  -- folded BN bias  * 0.25, tiled twice
    w_ref : (KP, NP)  bf16 -- 1x1 conv weight, transposed, K/N padded to 128
    o_ref : (RB*WO, NP) f32 -- pooled conv output tile
    """
    kp = w_ref.shape[0]
    s = s_ref[...]
    b = b_ref[...]
    # BN + ReLU on all four taps at once; f32 VALU work rides under the MXU op.
    y = jnp.maximum(x_ref[...].astype(jnp.float32) * s + b, 0.0)
    # 2x2 average pool as a balanced add tree (0.25 already folded into s, b).
    a = y[:, 0] + y[:, 1]                 # sum over H parity -> (RB, WO, 2*KP)
    a = a[..., :kp] + a[..., kp:]         # sum over W parity -> (RB, WO, KP)
    # Merge leading dims for the matmul (free when WO % 8 == 0).
    a = a.reshape(-1, kp).astype(w_ref.dtype)               # (RB*WO, KP) bf16
    o_ref[...] = jnp.dot(a, w_ref[...], preferred_element_type=jnp.float32)


# ----------------------------------------------------------------------------
# parameters
# ----------------------------------------------------------------------------
def init_transition_params(key, inplanes, outplanes, eps=1e-5):
    """Raw parameters mirroring nn.BatchNorm2d + nn.Conv2d(1x1, bias=False)."""
    k1, k2, k3, k4, k5 = jax.random.split(key, 5)
    w = jax.random.normal(k1, (outplanes, inplanes, 1, 1),
                          jnp.float32) / math.sqrt(inplanes)
    return dict(
        w=w,
        gamma=1.0 + 0.1 * jax.random.normal(k2, (inplanes,), jnp.float32),
        beta=0.1 * jax.random.normal(k3, (inplanes,), jnp.float32),
        mean=0.1 * jax.random.normal(k4, (inplanes,), jnp.float32),
        var=1.0 + 0.1 * jnp.abs(jax.random.normal(k5, (inplanes,), jnp.float32)),
        eps=eps,
    )


def prepare_params(raw):
    """Fold BN (inference stats) AND the avg-pool 0.25 into per-channel
    scale/bias, tile them to the kernel's (W-parity, channel) lane layout, and
    pre-pack the conv weight (transpose, pad K/N to 128, cast bf16) ONCE."""
    w = raw["w"]  # (Cout, Cin, 1, 1)
    cout, cin = w.shape[0], w.shape[1]
    scale = raw["gamma"] / jnp.sqrt(raw["var"] + raw["eps"])
    bias = raw["beta"] - raw["mean"] * scale
    scale = 0.25 * scale            # relu(z) * 0.25 == relu(0.25 * z)
    bias = 0.25 * bias
    kp = _round_up(cin, 128)
    np_ = _round_up(cout, 128)
    scale = jnp.pad(scale, (0, kp - cin))
    bias = jnp.pad(bias, (0, kp - cin))
    w_kn = jnp.pad(w.reshape(cout, cin).T, ((0, kp - cin), (0, np_ - cout)))
    return dict(
        scale2=jnp.tile(scale, 2).reshape(1, 2 * kp),
        bias2=jnp.tile(bias, 2).reshape(1, 2 * kp),
        w_kn=w_kn.astype(jnp.bfloat16),
        cout=cout,
        cin=cin,
    )


# ----------------------------------------------------------------------------
# forward
# ----------------------------------------------------------------------------
def transition_forward(x_nchw, prep):
    """_Transition.forward: avg_pool2d(conv1x1(relu(bn(x))), 2). NCHW in/out."""
    s2, b2, w_kn, cout = prep["scale2"], prep["bias2"], prep["w_kn"], prep["cout"]
    kp, np_ = w_kn.shape
    n, c, h, w = x_nchw.shape
    assert c == prep["cin"]
    ho, wo = h // 2, w // 2
    r = n * ho                       # pool row-groups
    m = r * wo                       # pooled output rows

    # Boundary layout work only: NCHW -> NHWC, crop to even H/W, cast to bf16
    # and pad channels to the 128-multiple the weight was packed for -- one
    # fused XLA pass (the pad is a no-op for 128-multiple channel counts).
    x = jnp.transpose(x_nchw, (0, 2, 3, 1))[:, :2 * ho, :2 * wo, :]
    x = x.astype(jnp.bfloat16)
    if kp != c:
        x = jnp.pad(x, ((0, 0), (0, 0), (0, 0), (0, kp - c)))
    # Zero-copy view: (n, 2ho, 2wo, kp) -> (n*ho, 2, wo, 2*kp).  The four pool
    # taps are sliced back out inside the kernel, so no tap gather hits HBM.
    x = x.reshape(r, 2, wo, 2 * kp)

    rb, vmem_est = _tile_rows(r, wo, kp, np_)

    cost = pl.CostEstimate(
        flops=2 * m * kp * np_ + 16 * m * kp,
        transcendentals=0,
        bytes_accessed=x.size * 2 + w_kn.size * 2 + m * np_ * 4 + 4 * kp * 4,
    )

    out = pl.pallas_call(
        _transition_kernel,
        out_shape=jax.ShapeDtypeStruct((m, np_), jnp.float32),
        grid=(pl.cdiv(r, rb),),
        in_specs=[
            pl.BlockSpec((rb, 2, wo, 2 * kp), lambda i: (i, 0, 0, 0)),
            pl.BlockSpec((1, 2 * kp), lambda i: (0, 0)),
            pl.BlockSpec((1, 2 * kp), lambda i: (0, 0)),
            # Constant block index -> the weight is DMA'd once and stays
            # resident in VMEM for every M tile.
            pl.BlockSpec((kp, np_), lambda i: (0, 0)),
        ],
        out_specs=pl.BlockSpec((rb * wo, np_), lambda i: (i, 0)),
        compiler_params=pltpu.CompilerParams(
            dimension_semantics=("parallel",),
            vmem_limit_bytes=min(48 * 1024 * 1024,
                                 vmem_est + 16 * 1024 * 1024),
        ),
        cost_estimate=cost,
    )(x, s2, b2, w_kn)

    out = out.reshape(n, ho, wo, np_)[..., :cout]
    return jnp.transpose(out, (0, 3, 1, 2))      # NHWC -> NCHW


# ----------------------------------------------------------------------------
# pure-JAX f32 reference (mirrors the PyTorch module op-for-op)
# ----------------------------------------------------------------------------
def transition_reference(x_nchw, raw):
    scale = raw["gamma"] / jnp.sqrt(raw["var"] + raw["eps"])
    bias = raw["beta"] - raw["mean"] * scale
    y = x_nchw * scale[None, :, None, None] + bias[None, :, None, None]
    y = jnp.maximum(y, 0.0)
    wmat = raw["w"].reshape(raw["w"].shape[0], raw["w"].shape[1])  # (Co, Ci)
    out = jnp.einsum("nchw,oc->nohw", y, wmat)
    n, co, h, w = out.shape
    out = out[:, :, :h // 2 * 2, :w // 2 * 2]
    return out.reshape(n, co, h // 2, 2, w // 2, 2).mean(axis=(3, 5))


# ----------------------------------------------------------------------------
if __name__ == "__main__":
    key = jax.random.PRNGKey(0)
    pkey, xkey = jax.random.split(key)

    # DenseNet-style transition: inplanes = 64 + 1*32 = 96, reduction 0.5 -> 48
    inplanes, outplanes = 96, 48
    raw = init_transition_params(pkey, inplanes, outplanes)
    prepared = prepare_params(raw)

    x = jax.random.normal(xkey, (2, inplanes, 16, 16), jnp.float32)  # NCHW

    fwd = jax.jit(lambda xx: transition_forward(xx, prepared))
    y = jax.block_until_ready(fwd(x))
    assert y.shape == (2, outplanes, 8, 8) and y.dtype == jnp.float32

    y_ref = transition_reference(x, raw)
    max_err = float(jnp.max(jnp.abs(y - y_ref)))
    ref_scale = float(jnp.max(jnp.abs(y_ref))) + 1e-6
    assert max_err <= 5e-2 * ref_scale + 1e-3, f"mismatch: {max_err} vs {ref_scale}"

    print("KERNEL_OK")
</pallas_src>

<mosaic_0001>
module attributes {stable_mosaic.version = 11 : i64} {
  func.func @_transition_kernel(%arg0: i32, %arg1: memref<16x2x8x256xbf16, #tpu.memory_space<vmem>>, %arg2: memref<1x256xf32, #tpu.memory_space<vmem>>, %arg3: memref<1x256xf32, #tpu.memory_space<vmem>>, %arg4: memref<128x128xbf16, #tpu.memory_space<vmem>>, %arg5: memref<128x128xf32, #tpu.memory_space<vmem>>) attributes {dimension_semantics = [#tpu.dimension_semantics<parallel>], iteration_bounds = array<i64: 1>, scalar_prefetch = 0 : i64, scratch_operands = 0 : i64, tpu.core_type = #tpu.core_type<tc>, window_params = [{transform_indices = @transform_0, window_bounds = array<i64: 16, 2, 8, 256>}, {pipeline_mode = #tpu.pipeline_mode<synchronous>, transform_indices = @transform_1, window_bounds = array<i64: 1, 256>}, {pipeline_mode = #tpu.pipeline_mode<synchronous>, transform_indices = @transform_2, window_bounds = array<i64: 1, 256>}, {pipeline_mode = #tpu.pipeline_mode<synchronous>, transform_indices = @transform_3, window_bounds = array<i64: 128, 128>}, {transform_indices = @transform_4, window_bounds = array<i64: 128, 128>}]} {
    %c0 = arith.constant 0 : index
    %c0_0 = arith.constant 0 : index
    %0 = vector.load %arg2[%c0, %c0_0] : memref<1x256xf32, #tpu.memory_space<vmem>>, vector<1x256xf32>
    %c0_1 = arith.constant 0 : index
    %c0_2 = arith.constant 0 : index
    %1 = vector.load %arg3[%c0_1, %c0_2] : memref<1x256xf32, #tpu.memory_space<vmem>>, vector<1x256xf32>
    %c0_3 = arith.constant 0 : index
    %c0_4 = arith.constant 0 : index
    %c0_5 = arith.constant 0 : index
    %c0_6 = arith.constant 0 : index
    %2 = vector.load %arg1[%c0_3, %c0_4, %c0_5, %c0_6] : memref<16x2x8x256xbf16, #tpu.memory_space<vmem>>, vector<16x2x8x256xbf16>
    %3 = arith.extf %2 : vector<16x2x8x256xbf16> to vector<16x2x8x256xf32>
    %4 = vector.shape_cast %0 : vector<1x256xf32> to vector<1x1x1x256xf32>
    %5 = vector.broadcast %4 : vector<1x1x1x256xf32> to vector<16x2x8x256xf32>
    %6 = arith.mulf %3, %5 : vector<16x2x8x256xf32>
    %7 = vector.shape_cast %1 : vector<1x256xf32> to vector<1x1x1x256xf32>
    %8 = vector.broadcast %7 : vector<1x1x1x256xf32> to vector<16x2x8x256xf32>
    %9 = arith.addf %6, %8 : vector<16x2x8x256xf32>
    %cst = arith.constant 0.000000e+00 : f32
    %10 = vector.broadcast %cst : f32 to vector<16x2x8x256xf32>
    %11 = arith.maximumf %9, %10 : vector<16x2x8x256xf32>
    %12 = vector.extract_strided_slice %11 {offsets = [0, 0, 0, 0], sizes = [16, 1, 8, 256], strides = [1, 1, 1, 1]} : vector<16x2x8x256xf32> to vector<16x1x8x256xf32>
    %13 = vector.shape_cast %12 : vector<16x1x8x256xf32> to vector<16x8x256xf32>
    %14 = vector.extract_strided_slice %11 {offsets = [0, 1, 0, 0], sizes = [16, 1, 8, 256], strides = [1, 1, 1, 1]} : vector<16x2x8x256xf32> to vector<16x1x8x256xf32>
    %15 = vector.shape_cast %14 : vector<16x1x8x256xf32> to vector<16x8x256xf32>
    %16 = arith.addf %13, %15 : vector<16x8x256xf32>
    %17 = vector.extract_strided_slice %16 {offsets = [0, 0, 0], sizes = [16, 8, 128], strides = [1, 1, 1]} : vector<16x8x256xf32> to vector<16x8x128xf32>
    %18 = vector.extract_strided_slice %16 {offsets = [0, 0, 128], sizes = [16, 8, 128], strides = [1, 1, 1]} : vector<16x8x256xf32> to vector<16x8x128xf32>
    %19 = arith.addf %17, %18 : vector<16x8x128xf32>
    %20 = vector.shape_cast %19 : vector<16x8x128xf32> to vector<128x128xf32>
    %21 = arith.truncf %20 : vector<128x128xf32> to vector<128x128xbf16>
    %c0_7 = arith.constant 0 : index
    %c0_8 = arith.constant 0 : index
    %22 = vector.load %arg4[%c0_7, %c0_8] : memref<128x128xbf16, #tpu.memory_space<vmem>>, vector<128x128xbf16>
    %cst_9 = arith.constant dense<0.000000e+00> : vector<128x128xf32>
    %23 = tpu.matmul %21, %22, %cst_9 {dimension_numbers = #tpu.dot_dimension_numbers<[1], [0], [0], [1], [0, 0, 1, 1], [], []>} : vector<128x128xbf16>, vector<128x128xbf16>, vector<128x128xf32> -> vector<128x128xf32>
    %c0_10 = arith.constant 0 : index
    %c0_11 = arith.constant 0 : index
    %24 = vector.load %arg5[%c0_10, %c0_11] : memref<128x128xf32, #tpu.memory_space<vmem>>, vector<128x128xf32>
    tpu.vector_store %arg5[%c0_10, %c0_11], %23 {strides = array<i32>} : memref<128x128xf32, #tpu.memory_space<vmem>>, vector<128x128xf32>,
    return
  }
  func.func @transform_0(%arg0: i32) -> (i32, i32, i32, i32) {
    %c0_i32 = arith.constant 0 : i32
    %c0_i32_0 = arith.constant 0 : i32
    %c0_i32_1 = arith.constant 0 : i32
    %c0_i32_2 = arith.constant 0 : i32
    return %arg0, %c0_i32, %c0_i32_0, %c0_i32_1 : i32, i32, i32, i32
  }
  func.func @transform_1(%arg0: i32) -> (i32, i32) {
    %c0_i32 = arith.constant 0 : i32
    %c0_i32_0 = arith.constant 0 : i32
    %c0_i32_1 = arith.constant 0 : i32
    return %c0_i32, %c0_i32_0 : i32, i32
  }
  func.func @transform_2(%arg0: i32) -> (i32, i32) {
    %c0_i32 = arith.constant 0 : i32
    %c0_i32_0 = arith.constant 0 : i32
    %c0_i32_1 = arith.constant 0 : i32
    return %c0_i32, %c0_i32_0 : i32, i32
  }
  func.func @transform_3(%arg0: i32) -> (i32, i32) {
    %c0_i32 = arith.constant 0 : i32
    %c0_i32_0 = arith.constant 0 : i32
    %c0_i32_1 = arith.constant 0 : i32
    return %c0_i32, %c0_i32_0 : i32, i32
  }
  func.func @transform_4(%arg0: i32) -> (i32, i32) {
    %c0_i32 = arith.constant 0 : i32
    %c0_i32_0 = arith.constant 0 : i32
    return %arg0, %c0_i32 : i32, i32
  }
}

</mosaic_0001>

<llo_original>
// kernel: _lambda_.1
$region0: #{_lambda_.1}
  #allocation0 [shape = 'u32[]', space=smem, size = 0x4, offset = 0x4, fixed_abs, tag = 'smem constant byte address 0x4 - core index']
  #allocation1 [shape = 'u32[144,128]{1,0:T(1,128)}', space=vmem, size = 0x12000, scoped, tag = 'internal scratch']
  %s0 = inlined_call_operand.vmem [shape: bf16[16,2,8,256], index: 0, kind: input, shape index: {}]
  %s1 = inlined_call_operand.vmem [shape: f32[1,256], index: 1, kind: input, shape index: {}]
  %s2 = inlined_call_operand.vmem [shape: f32[1,256], index: 2, kind: input, shape index: {}]
  %s3 = inlined_call_operand.vmem [shape: bf16[128,128], index: 3, kind: input, shape index: {}]
  %s4 = inlined_call_operand.vmem [shape: f32[128,128], index: 4, kind: output, shape index: {}]
  %s5 = sld [smem:[#allocation0]]
  $region26: #{_lambda_.1} parent=0
    _
  %s7 = ssub.s32 1, %s5
  %s8 = scalar_select 0, %s7, %s5
  // Predicated region
  $region2: #{_lambda_.1} parent=0 // pred_check
    _
  $region3: #{_lambda_.1} parent=0 // pred_check_branch
    %10 = sbr.rel (0) target = $region5
  $region4: #{_lambda_.1} parent=0 // pred_region
    _
  $region5: #{_lambda_.1} parent=0 // pred_fallthru
    _
  // Predicated region
  $region6: #{_lambda_.1} parent=0 // pred_check
    _
  $region7: #{_lambda_.1} parent=0 // pred_check_branch
    %12 = sbr.rel (0) target = $region9
  $region8: #{_lambda_.1} parent=0 // pred_region
    _
  $region9: #{_lambda_.1} parent=0 // pred_fallthru
    _
  // Predicated region
  $region10: #{_lambda_.1} parent=0 // pred_check
    _
  $region11: #{_lambda_.1} parent=0 // pred_check_branch
    %14 = sbr.rel (0) target = $region13
  $region12: #{_lambda_.1} parent=0 // pred_region
    _
  $region13: #{_lambda_.1} parent=0 // pred_fallthru
    _
  // Predicated region
  $region14: #{_lambda_.1} parent=0 // pred_check
    _
  $region15: #{_lambda_.1} parent=0 // pred_check_branch
    %16 = sbr.rel (0) target = $region17
  $region16: #{_lambda_.1} parent=0 // pred_region
    _
  $region17: #{_lambda_.1} parent=0 // pred_fallthru
    _
  %v18 = vld [vmem:[%s1] sm:$0x3]
  %v19 = vld [vmem:[%s2] sm:$0x3]
  %v20 = vld [vmem:[%s0] sm:$0xff]
  %v21 = vld [vmem:[%s0 + $0x8] sm:$0xff]
  %v22 = vld [vmem:[%s0 + $0x10] sm:$0xff]
  %v23 = vld [vmem:[%s0 + $0x18] sm:$0xff]
  %v24 = vld [vmem:[%s0 + $0x20] sm:$0xff]
  %v25 = vld [vmem:[%s0 + $0x28] sm:$0xff]
  %v26 = vld [vmem:[%s0 + $0x30] sm:$0xff]
  %v27 = vld [vmem:[%s0 + $0x38] sm:$0xff]
  %v28 = vld [vmem:[%s0 + $0x40] sm:$0xff]
  %v29 = vld [vmem:[%s0 + $0x48] sm:$0xff]
  %v30 = vld [vmem:[%s0 + $0x50] sm:$0xff]
  %v31 = vld [vmem:[%s0 + $0x58] sm:$0xff]
  %v32 = vld [vmem:[%s0 + $0x60] sm:$0xff]
  %v33 = vld [vmem:[%s0 + $0x68] sm:$0xff]
  %v34 = vld [vmem:[%s0 + $0x70] sm:$0xff]
  %v35 = vld [vmem:[%s0 + $0x78] sm:$0xff]
  %v36 = vld [vmem:[%s0 + $0x80] sm:$0xff]
  %v37 = vld [vmem:[%s0 + $0x88] sm:$0xff]
  %v38 = vld [vmem:[%s0 + $0x90] sm:$0xff]
  %v39 = vld [vmem:[%s0 + $0x98] sm:$0xff]
  %v40 = vld [vmem:[%s0 + $0xa0] sm:$0xff]
  %v41 = vld [vmem:[%s0 + $0xa8] sm:$0xff]
  %v42 = vld [vmem:[%s0 + $0xb0] sm:$0xff]
  %v43 = vld [vmem:[%s0 + $0xb8] sm:$0xff]
  %v44 = vld [vmem:[%s0 + $0xc0] sm:$0xff]
  %v45 = vld [vmem:[%s0 + $0xc8] sm:$0xff]
  %v46 = vld [vmem:[%s0 + $0xd0] sm:$0xff]
  %v47 = vld [vmem:[%s0 + $0xd8] sm:$0xff]
  %v48 = vld [vmem:[%s0 + $0xe0] sm:$0xff]
  %v49 = vld [vmem:[%s0 + $0xe8] sm:$0xff]
  %v50 = vld [vmem:[%s0 + $0xf0] sm:$0xff]
  %v51 = vld [vmem:[%s0 + $0xf8] sm:$0xff]
  %v52 = vunpack.c.l.bf16 %v20
  %v53 = vunpack.c.h.bf16 %v20
  %v54 = vunpack.c.l.bf16 %v21
  %v55 = vunpack.c.h.bf16 %v21
  %v56 = vunpack.c.l.bf16 %v22
  %v57 = vunpack.c.h.bf16 %v22
  %v58 = vunpack.c.l.bf16 %v23
  %v59 = vunpack.c.h.bf16 %v23
  %v60 = vunpack.c.l.bf16 %v24
  %v61 = vunpack.c.h.bf16 %v24
  %v62 = vunpack.c.l.bf16 %v25
  %v63 = vunpack.c.h.bf16 %v25
  %v64 = vunpack.c.l.bf16 %v26
  %v65 = vunpack.c.h.bf16 %v26
  %v66 = vunpack.c.l.bf16 %v27
  %v67 = vunpack.c.h.bf16 %v27
  %v68 = vunpack.c.l.bf16 %v28
  %v69 = vunpack.c.h.bf16 %v28
  %v70 = vunpack.c.l.bf16 %v29
  %v71 = vunpack.c.h.bf16 %v29
  %v72 = vunpack.c.l.bf16 %v30
  %v73 = vunpack.c.h.bf16 %v30
  %v74 = vunpack.c.l.bf16 %v31
  %v75 = vunpack.c.h.bf16 %v31
  %v76 = vunpack.c.l.bf16 %v32
  %v77 = vunpack.c.h.bf16 %v32
  %v78 = vunpack.c.l.bf16 %v33
  %v79 = vunpack.c.h.bf16 %v33
  %v80 = vunpack.c.l.bf16 %v34
  %v81 = vunpack.c.h.bf16 %v34
  %v82 = vunpack.c.l.bf16 %v35
  %v83 = vunpack.c.h.bf16 %v35
  %v84 = vunpack.c.l.bf16 %v36
  %v85 = vunpack.c.h.bf16 %v36
  %v86 = vunpack.c.l.bf16 %v37
  %v87 = vunpack.c.h.bf16 %v37
  %v88 = vunpack.c.l.bf16 %v38
  %v89 = vunpack.c.h.bf16 %v38
  %v90 = vunpack.c.l.bf16 %v39
  %v91 = vunpack.c.h.bf16 %v39
  %v92 = vunpack.c.l.bf16 %v40
  %v93 = vunpack.c.h.bf16 %v40
  %v94 = vunpack.c.l.bf16 %v41
  %v95 = vunpack.c.h.bf16 %v41
  %v96 = vunpack.c.l.bf16 %v42
  %v97 = vunpack.c.h.bf16 %v42
  %v98 = vunpack.c.l.bf16 %v43
  %v99 = vunpack.c.h.bf16 %v43
  %v100 = vunpack.c.l.bf16 %v44
  %v101 = vunpack.c.h.bf16 %v44
  %v102 = vunpack.c.l.bf16 %v45
  %v103 = vunpack.c.h.bf16 %v45
  %v104 = vunpack.c.l.bf16 %v46
  %v105 = vunpack.c.h.bf16 %v46
  %v106 = vunpack.c.l.bf16 %v47
  %v107 = vunpack.c.h.bf16 %v47
  %v108 = vunpack.c.l.bf16 %v48
  %v109 = vunpack.c.h.bf16 %v48
  %v110 = vunpack.c.l.bf16 %v49
  %v111 = vunpack.c.h.bf16 %v49
  %v112 = vunpack.c.l.bf16 %v50
  %v113 = vunpack.c.h.bf16 %v50
  %v114 = vunpack.c.l.bf16 %v51
  %v115 = vunpack.c.h.bf16 %v51
  %v117 = vlaneseq
  %v118 = vshrl.u32 %v117, 7
  %v119 = vsub.s32 0, %v118
  %v120 = vrot.slane %v18, %v119
  %v121 = vlaneseq
  %v122 = vshrl.u32 %v121, 7
  %v123 = vsub.s32 1, %v122
  %v124 = vrot.slane %v18, %v123
  %v127 = vmul.f32 %v52, %v120
  %v128 = vmul.f32 %v53, %v124
  %v129 = vmul.f32 %v54, %v120
  %v130 = vmul.f32 %v55, %v124
  %v131 = vmul.f32 %v56, %v120
  %v132 = vmul.f32 %v57, %v124
  %v133 = vmul.f32 %v58, %v120
  %v134 = vmul.f32 %v59, %v124
  %v135 = vmul.f32 %v60, %v120
  %v136 = vmul.f32 %v61, %v124
  %v137 = vmul.f32 %v62, %v120
  %v138 = vmul.f32 %v63, %v124
  %v139 = vmul.f32 %v64, %v120
  %v140 = vmul.f32 %v65, %v124
  %v141 = vmul.f32 %v66, %v120
  %v142 = vmul.f32 %v67, %v124
  %v143 = vmul.f32 %v68, %v120
  %v144 = vmul.f32 %v69, %v124
  %v145 = vmul.f32 %v70, %v120
  %v146 = vmul.f32 %v71, %v124
  %v147 = vmul.f32 %v72, %v120
  %v148 = vmul.f32 %v73, %v124
  %v149 = vmul.f32 %v74, %v120
  %v150 = vmul.f32 %v75, %v124
  %v151 = vmul.f32 %v76, %v120
  %v152 = vmul.f32 %v77, %v124
  %v153 = vmul.f32 %v78, %v120
  %v154 = vmul.f32 %v79, %v124
  %v155 = vmul.f32 %v80, %v120
  %v156 = vmul.f32 %v81, %v124
  %v157 = vmul.f32 %v82, %v120
  %v158 = vmul.f32 %v83, %v124
  %v159 = vmul.f32 %v84, %v120
  %v160 = vmul.f32 %v85, %v124
  %v161 = vmul.f32 %v86, %v120
  %v162 = vmul.f32 %v87, %v124
  %v163 = vmul.f32 %v88, %v120
  %v164 = vmul.f32 %v89, %v124
  %v165 = vmul.f32 %v90, %v120
  %v166 = vmul.f32 %v91, %v124
  %v167 = vmul.f32 %v92, %v120
  %v168 = vmul.f32 %v93, %v124
  %v169 = vmul.f32 %v94, %v120
  %v170 = vmul.f32 %v95, %v124
  %v171 = vmul.f32 %v96, %v120
  %v172 = vmul.f32 %v97, %v124
  %v173 = vmul.f32 %v98, %v120
  %v174 = vmul.f32 %v99, %v124
  %v175 = vmul.f32 %v100, %v120
  %v176 = vmul.f32 %v101, %v124
  %v177 = vmul.f32 %v102, %v120
  %v178 = vmul.f32 %v103, %v124
  %v179 = vmul.f32 %v104, %v120
  %v180 = vmul.f32 %v105, %v124
  %v181 = vmul.f32 %v106, %v120
  %v182 = vmul.f32 %v107, %v124
  %v183 = vmul.f32 %v108, %v120
  %v184 = vmul.f32 %v109, %v124
  %v185 = vmul.f32 %v110, %v120
  %v186 = vmul.f32 %v111, %v124
  %v187 = vmul.f32 %v112, %v120
  %v188 = vmul.f32 %v113, %v124
  %v189 = vmul.f32 %v114, %v120
  %v190 = vmul.f32 %v115, %v124
  %v192 = vlaneseq
  %v193 = vshrl.u32 %v192, 7
  %v194 = vsub.s32 0, %v193
  %v195 = vrot.slane %v19, %v194
  %v196 = vlaneseq
  %v197 = vshrl.u32 %v196, 7
  %v198 = vsub.s32 1, %v197
  %v199 = vrot.slane %v19, %v198
  %v202 = vadd.f32 %v127, %v195
  %v203 = vadd.f32 %v128, %v199
  %v204 = vadd.f32 %v129, %v195
  %v205 = vadd.f32 %v130, %v199
  %v206 = vadd.f32 %v131, %v195
  %v207 = vadd.f32 %v132, %v199
  %v208 = vadd.f32 %v133, %v195
  %v209 = vadd.f32 %v134, %v199
  %v210 = vadd.f32 %v135, %v195
  %v211 = vadd.f32 %v136, %v199
  %v212 = vadd.f32 %v137, %v195
  %v213 = vadd.f32 %v138, %v199
  %v214 = vadd.f32 %v139, %v195
  %v215 = vadd.f32 %v140, %v199
  %v216 = vadd.f32 %v141, %v195
  %v217 = vadd.f32 %v142, %v199
  %v218 = vadd.f32 %v143, %v195
  %v219 = vadd.f32 %v144, %v199
  %v220 = vadd.f32 %v145, %v195
  %v221 = vadd.f32 %v146, %v199
  %v222 = vadd.f32 %v147, %v195
  %v223 = vadd.f32 %v148, %v199
  %v224 = vadd.f32 %v149, %v195
  %v225 = vadd.f32 %v150, %v199
  %v226 = vadd.f32 %v151, %v195
  %v227 = vadd.f32 %v152, %v199
  %v228 = vadd.f32 %v153, %v195
  %v229 = vadd.f32 %v154, %v199
  %v230 = vadd.f32 %v155, %v195
  %v231 = vadd.f32 %v156, %v199
  %v232 = vadd.f32 %v157, %v195
  %v233 = vadd.f32 %v158, %v199
  %v234 = vadd.f32 %v159, %v195
  %v235 = vadd.f32 %v160, %v199
  %v236 = vadd.f32 %v161, %v195
  %v237 = vadd.f32 %v162, %v199
  %v238 = vadd.f32 %v163, %v195
  %v239 = vadd.f32 %v164, %v199
  %v240 = vadd.f32 %v165, %v195
  %v241 = vadd.f32 %v166, %v199
  %v242 = vadd.f32 %v167, %v195
  %v243 = vadd.f32 %v168, %v199
  %v244 = vadd.f32 %v169, %v195
  %v245 = vadd.f32 %v170, %v199
  %v246 = vadd.f32 %v171, %v195
  %v247 = vadd.f32 %v172, %v199
  %v248 = vadd.f32 %v173, %v195
  %v249 = vadd.f32 %v174, %v199
  %v250 = vadd.f32 %v175, %v195
  %v251 = vadd.f32 %v176, %v199
  %v252 = vadd.f32 %v177, %v195
  %v253 = vadd.f32 %v178, %v199
  %v254 = vadd.f32 %v179, %v195
  %v255 = vadd.f32 %v180, %v199
  %v256 = vadd.f32 %v181, %v195
  %v257 = vadd.f32 %v182, %v199
  %v258 = vadd.f32 %v183, %v195
  %v259 = vadd.f32 %v184, %v199
  %v260 = vadd.f32 %v185, %v195
  %v261 = vadd.f32 %v186, %v199
  %v262 = vadd.f32 %v187, %v195
  %v263 = vadd.f32 %v188, %v199
  %v264 = vadd.f32 %v189, %v195
  %v265 = vadd.f32 %v190, %v199
  %v266 = vmax.f32 %v202, 0.0
  %v267 = vmax.f32 %v203, 0.0
  %v268 = vmax.f32 %v204, 0.0
  %v269 = vmax.f32 %v205, 0.0
  %v270 = vmax.f32 %v206, 0.0
  %v271 = vmax.f32 %v207, 0.0
  %v272 = vmax.f32 %v208, 0.0
  %v273 = vmax.f32 %v209, 0.0
  %v274 = vmax.f32 %v210, 0.0
  %v275 = vmax.f32 %v211, 0.0
  %v276 = vmax.f32 %v212, 0.0
  %v277 = vmax.f32 %v213, 0.0
  %v278 = vmax.f32 %v214, 0.0
  %v279 = vmax.f32 %v215, 0.0
  %v280 = vmax.f32 %v216, 0.0
  %v281 = vmax.f32 %v217, 0.0
  %v282 = vmax.f32 %v218, 0.0
  %v283 = vmax.f32 %v219, 0.0
  %v284 = vmax.f32 %v220, 0.0
  %v285 = vmax.f32 %v221, 0.0
  %v286 = vmax.f32 %v222, 0.0
  %v287 = vmax.f32 %v223, 0.0
  %v288 = vmax.f32 %v224, 0.0
  %v289 = vmax.f32 %v225, 0.0
  %v290 = vmax.f32 %v226, 0.0
  %v291 = vmax.f32 %v227, 0.0
  %v292 = vmax.f32 %v228, 0.0
  %v293 = vmax.f32 %v229, 0.0
  %v294 = vmax.f32 %v230, 0.0
  %v295 = vmax.f32 %v231, 0.0
  %v296 = vmax.f32 %v232, 0.0
  %v297 = vmax.f32 %v233, 0.0
  %v298 = vmax.f32 %v234, 0.0
  %v299 = vmax.f32 %v235, 0.0
  %v300 = vmax.f32 %v236, 0.0
  %v301 = vmax.f32 %v237, 0.0
  %v302 = vmax.f32 %v238, 0.0
  %v303 = vmax.f32 %v239, 0.0
  %v304 = vmax.f32 %v240, 0.0
  %v305 = vmax.f32 %v241, 0.0
  %v306 = vmax.f32 %v242, 0.0
  %v307 = vmax.f32 %v243, 0.0
  %v308 = vmax.f32 %v244, 0.0
  %v309 = vmax.f32 %v245, 0.0
  %v310 = vmax.f32 %v246, 0.0
  %v311 = vmax.f32 %v247, 0.0
  %v312 = vmax.f32 %v248, 0.0
  %v313 = vmax.f32 %v249, 0.0
  %v314 = vmax.f32 %v250, 0.0
  %v315 = vmax.f32 %v251, 0.0
  %v316 = vmax.f32 %v252, 0.0
  %v317 = vmax.f32 %v253, 0.0
  %v318 = vmax.f32 %v254, 0.0
  %v319 = vmax.f32 %v255, 0.0
  %v320 = vmax.f32 %v256, 0.0
  %v321 = vmax.f32 %v257, 0.0
  %v322 = vmax.f32 %v258, 0.0
  %v323 = vmax.f32 %v259, 0.0
  %v324 = vmax.f32 %v260, 0.0
  %v325 = vmax.f32 %v261, 0.0
  %v326 = vmax.f32 %v262, 0.0
  %v327 = vmax.f32 %v263, 0.0
  %v328 = vmax.f32 %v264, 0.0
  %v329 = vmax.f32 %v265, 0.0
  %v330 = vadd.f32 %v266, %v268
  %v331 = vadd.f32 %v267, %v269
  %v332 = vadd.f32 %v270, %v272
  %v333 = vadd.f32 %v271, %v273
  %v334 = vadd.f32 %v274, %v276
  %v335 = vadd.f32 %v275, %v277
  %v336 = vadd.f32 %v278, %v280
  %v337 = vadd.f32 %v279, %v281
  %v338 = vadd.f32 %v282, %v284
  %v339 = vadd.f32 %v283, %v285
  %v340 = vadd.f32 %v286, %v288
  %v341 = vadd.f32 %v287, %v289
  %v342 = vadd.f32 %v290, %v292
  %v343 = vadd.f32 %v291, %v293
  %v344 = vadd.f32 %v294, %v296
  %v345 = vadd.f32 %v295, %v297
  %v346 = vadd.f32 %v298, %v300
  %v347 = vadd.f32 %v299, %v301
  %v348 = vadd.f32 %v302, %v304
  %v349 = vadd.f32 %v303, %v305
  %v350 = vadd.f32 %v306, %v308
  %v351 = vadd.f32 %v307, %v309
  %v352 = vadd.f32 %v310, %v312
  %v353 = vadd.f32 %v311, %v313
  %v354 = vadd.f32 %v314, %v316
  %v355 = vadd.f32 %v315, %v317
  %v356 = vadd.f32 %v318, %v320
  %v357 = vadd.f32 %v319, %v321
  %v358 = vadd.f32 %v322, %v324
  %v359 = vadd.f32 %v323, %v325
  %v360 = vadd.f32 %v326, %v328
  %v361 = vadd.f32 %v327, %v329
  %v362 = vadd.f32 %v330, %v331
  %v363 = vadd.f32 %v332, %v333
  %v364 = vadd.f32 %v334, %v335
  %v365 = vadd.f32 %v336, %v337
  %v366 = vadd.f32 %v338, %v339
  %v367 = vadd.f32 %v340, %v341
  %v368 = vadd.f32 %v342, %v343
  %v369 = vadd.f32 %v344, %v345
  %v370 = vadd.f32 %v346, %v347
  %v371 = vadd.f32 %v348, %v349
  %v372 = vadd.f32 %v350, %v351
  %v373 = vadd.f32 %v352, %v353
  %v374 = vadd.f32 %v354, %v355
  %v375 = vadd.f32 %v356, %v357
  %v376 = vadd.f32 %v358, %v359
  %v377 = vadd.f32 %v360, %v361
  %v378 = vpack.c.bf16 %v363, %v362
  %v379 = vpack.c.bf16 %v365, %v364
  %v380 = vpack.c.bf16 %v367, %v366
  %v381 = vpack.c.bf16 %v369, %v368
  %v382 = vpack.c.bf16 %v371, %v370
  %v383 = vpack.c.bf16 %v373, %v372
  %v384 = vpack.c.bf16 %v375, %v374
  %v385 = vpack.c.bf16 %v377, %v376
  %v386 = vld [vmem:[%s3] sm:$0xf]
  %v387 = vld [vmem:[%s3 + $0x4] sm:$0xf]
  %v388 = vld [vmem:[%s3 + $0x8] sm:$0xf]
  %v389 = vld [vmem:[%s3 + $0xc] sm:$0xf]
  %v390 = vld [vmem:[%s3 + $0x10] sm:$0xf]
  %v391 = vld [vmem:[%s3 + $0x14] sm:$0xf]
  %v392 = vld [vmem:[%s3 + $0x18] sm:$0xf]
  %v393 = vld [vmem:[%s3 + $0x1c] sm:$0xf]
  %v394 = vld [vmem:[%s3 + $0x20] sm:$0xf]
  %v395 = vld [vmem:[%s3 + $0x24] sm:$0xf]
  %v396 = vld [vmem:[%s3 + $0x28] sm:$0xf]
  %v397 = vld [vmem:[%s3 + $0x2c] sm:$0xf]
  %v398 = vld [vmem:[%s3 + $0x30] sm:$0xf]
  %v399 = vld [vmem:[%s3 + $0x34] sm:$0xf]
  %v400 = vld [vmem:[%s3 + $0x38] sm:$0xf]
  %v401 = vld [vmem:[%s3 + $0x3c] sm:$0xf]
  %v418 = vunpack.c.l.b16 %v386
  %v419 = vunpack.c.l.b16 %v387
  %v420 = vunpack.c.l.b16 %v388
  %v421 = vunpack.c.l.b16 %v389
  %v422 = vunpack.c.l.b16 %v390
  %v423 = vunpack.c.l.b16 %v391
  %v424 = vunpack.c.l.b16 %v392
  %v425 = vunpack.c.l.b16 %v393
  %v426 = vunpack.c.l.b16 %v394
  %v427 = vunpack.c.l.b16 %v395
  %v428 = vunpack.c.l.b16 %v396
  %v429 = vunpack.c.l.b16 %v397
  %v430 = vunpack.c.l.b16 %v398
  %v431 = vunpack.c.l.b16 %v399
  %v432 = vunpack.c.l.b16 %v400
  %v433 = vunpack.c.l.b16 %v401
  %v434 = vpack.c.b16 %v419, %v418
  %v435 = vpack.c.b16 %v421, %v420
  %v436 = vpack.c.b16 %v423, %v422
  %v437 = vpack.c.b16 %v425, %v424
  %v438 = vpack.c.b16 %v427, %v426
  %v439 = vpack.c.b16 %v429, %v428
  %v440 = vpack.c.b16 %v431, %v430
  %v441 = vpack.c.b16 %v433, %v432
  %450 = vmatprep.subr.bf16.mxu0 0
  %451 = vmatpush1.bf16.msra.mxu0 %v434
  %452 = vmatprep.subr.bf16.mxu0 0
  %453 = vmatpush1.bf16.msra.mxu0 %v435
  %454 = vmatprep.subr.bf16.mxu0 0
  %455 = vmatpush1.bf16.msra.mxu0 %v436
  %456 = vmatprep.subr.bf16.mxu0 0
  %457 = vmatpush1.bf16.msra.mxu0 %v437
  %458 = vmatprep.subr.bf16.mxu0 0
  %459 = vmatpush1.bf16.msra.mxu0 %v438
  %460 = vmatprep.subr.bf16.mxu0 0
  %461 = vmatpush1.bf16.msra.mxu0 %v439
  %462 = vmatprep.subr.bf16.mxu0 0
  %463 = vmatpush1.bf16.msra.mxu0 %v440
  %464 = vmatprep.subr.bf16.mxu0 0
  %465 = vmatpush1.bf16.msra.mxu0 %v441
  %466 = vmatprep.subr.bf16.mxu0 0
  %467 = vmatpush1.bf16.msra.mxu0 0
  %468 = vmatprep.subr.bf16.mxu0 0
  %469 = vmatpush1.bf16.msra.mxu0 0
  %470 = vmatprep.subr.bf16.mxu0 0
  %471 = vmatpush1.bf16.msra.mxu0 0
  %472 = vmatprep.subr.bf16.mxu0 0
  %473 = vmatpush1.bf16.msra.mxu0 0
  %474 = vmatprep.subr.bf16.mxu0 0
  %475 = vmatpush1.bf16.msra.mxu0 0
  %476 = vmatprep.subr.bf16.mxu0 0
  %477 = vmatpush1.bf16.msra.mxu0 0
  %478 = vmatprep.subr.bf16.mxu0 0
  %479 = vmatpush1.bf16.msra.mxu0 0
  %480 = vmatprep.subr.bf16.mxu0 0
  %481 = vmatpush1.bf16.msra.mxu0 0
  %482 = vmatprep.mubr.bf16.mxu0 0
  %483 = vmatmul.mubr.bf16.gmra.mrb[0].mxu0 %v378
  %v484 = vpop.f32.mrb[0].mxu0
  %v485 = vadd.f32 0.0, %v484
  %v486 = vpop.f32.mrb[0].mxu0
  %v487 = vpop.f32.mrb[0].mxu0
  %v488 = vadd.f32 0.0, %v487
  %v489 = vpop.f32.mrb[0].mxu0
  %490 = vmatprep.mubr.bf16.mxu0 0
  %491 = vmatmul.mubr.bf16.gmra.mrb[0].mxu0 %v379
  %v492 = vpop.f32.mrb[0].mxu0
  %v493 = vadd.f32 0.0, %v492
  %v494 = vpop.f32.mrb[0].mxu0
  %v495 = vpop.f32.mrb[0].mxu0
  %v496 = vadd.f32 0.0, %v495
  %v497 = vpop.f32.mrb[0].mxu0
  %498 = vmatprep.mubr.bf16.mxu0 0
  %499 = vmatmul.mubr.bf16.gmra.mrb[0].mxu0 %v380
  %v500 = vpop.f32.mrb[0].mxu0
  %v501 = vadd.f32 0.0, %v500
  %v502 = vpop.f32.mrb[0].mxu0
  %v503 = vpop.f32.mrb[0].mxu0
  %v504 = vadd.f32 0.0, %v503
  %v505 = vpop.f32.mrb[0].mxu0
  %506 = vmatprep.mubr.bf16.mxu0 0
  %507 = vmatmul.mubr.bf16.gmra.mrb[0].mxu0 %v381
  %v508 = vpop.f32.mrb[0].mxu0
  %v509 = vadd.f32 0.0, %v508
  %v510 = vpop.f32.mrb[0].mxu0
  %v511 = vpop.f32.mrb[0].mxu0
  %v512 = vadd.f32 0.0, %v511
  %v513 = vpop.f32.mrb[0].mxu0
  %514 = vmatprep.mubr.bf16.mxu0 0
  %515 = vmatmul.mubr.bf16.gmra.mrb[0].mxu0 %v382
  %v516 = vpop.f32.mrb[0].mxu0
  %v517 = vadd.f32 0.0, %v516
  %v518 = vpop.f32.mrb[0].mxu0
  %v519 = vpop.f32.mrb[0].mxu0
  %v520 = vadd.f32 0.0, %v519
  %v521 = vpop.f32.mrb[0].mxu0
  %522 = vmatprep.mubr.bf16.mxu0 0
  %523 = vmatmul.mubr.bf16.gmra.mrb[0].mxu0 %v383
  %v524 = vpop.f32.mrb[0].mxu0
  %v525 = vadd.f32 0.0, %v524
  %v526 = vpop.f32.mrb[0].mxu0
  %v527 = vpop.f32.mrb[0].mxu0
  %v528 = vadd.f32 0.0, %v527
  %v529 = vpop.f32.mrb[0].mxu0
  %530 = vmatprep.mubr.bf16.mxu0 0
  %531 = vmatmul.mubr.bf16.gmra.mrb[0].mxu0 %v384
  %v532 = vpop.f32.mrb[0].mxu0
  %v533 = vadd.f32 0.0, %v532
  %v534 = vpop.f32.mrb[0].mxu0
  %v535 = vpop.f32.mrb[0].mxu0
  %v536 = vadd.f32 0.0, %v535
  %v537 = vpop.f32.mrb[0].mxu0
  %538 = vmatprep.mubr.bf16.mxu0 0
  %539 = vmatmul.mubr.bf16.gmra.mrb[0].mxu0 %v385
  %v540 = vpop.f32.mrb[0].mxu0
  %v541 = vadd.f32 0.0, %v540
  %v542 = vpop.f32.mrb[0].mxu0
  %v543 = vpop.f32.mrb[0].mxu0
  %v544 = vadd.f32 0.0, %v543
  %v545 = vpop.f32.mrb[0].mxu0
  %546 = vdwg.mxu0
  %547 = vst [vmem:[%s4] sm:$0xff] %v485
  %548 = vst [vmem:[%s4 + $0x8] sm:$0xff] %v488
  %549 = vst [vmem:[%s4 + $0x10] sm:$0xff] %v493
  %550 = vst [vmem:[%s4 + $0x18] sm:$0xff] %v496
  %551 = vst [vmem:[%s4 + $0x20] sm:$0xff] %v501
  %552 = vst [vmem:[%s4 + $0x28] sm:$0xff] %v504
  %553 = vst [vmem:[%s4 + $0x30] sm:$0xff] %v509
  %554 = vst [vmem:[%s4 + $0x38] sm:$0xff] %v512
  %555 = vst [vmem:[%s4 + $0x40] sm:$0xff] %v517
  %556 = vst [vmem:[%s4 + $0x48] sm:$0xff] %v520
  %557 = vst [vmem:[%s4 + $0x50] sm:$0xff] %v525
  %558 = vst [vmem:[%s4 + $0x58] sm:$0xff] %v528
  %559 = vst [vmem:[%s4 + $0x60] sm:$0xff] %v533
  %560 = vst [vmem:[%s4 + $0x68] sm:$0xff] %v536
  %561 = vst [vmem:[%s4 + $0x70] sm:$0xff] %v541
  %562 = vst [vmem:[%s4 + $0x78] sm:$0xff] %v544
  // Predicated region
  $region18: #{_lambda_.1} parent=0 // pred_check
    _
  $region19: #{_lambda_.1} parent=0 // pred_check_branch
    %564 = sbr.rel (0) target = $region21
  $region20: #{_lambda_.1} parent=0 // pred_region
    _
  $region21: #{_lambda_.1} parent=0 // pred_fallthru
    _
  // Predicated region
  $region22: #{_lambda_.1} parent=0 // pred_check
    _
  $region23: #{_lambda_.1} parent=0 // pred_check_branch
    %566 = sbr.rel (0) target = $region25
  $region24: #{_lambda_.1} parent=0 // pred_region
    _
  $region25: #{_lambda_.1} parent=0 // pred_fallthru
    _

</llo_original>
